<compile_context>
chip_gen: v7x
topology: tpu7x:2x2x1
jax: 0.10.0
libtpu: 0.0.40
codegen_flags: <defaults>
</compile_context>

<pallas_src>
from functools import partial

import jax
import jax.numpy as jnp
from jax.experimental import pallas as pl
from jax.experimental.pallas import tpu as pltpu

LANE = 128  # lane width; for much larger hidden sizes on v6e/v7x pad to 256.


def _round_up(x: int, m: int) -> int:
    return (x + m - 1) // m * m


def mlp_kernel(x_ref, w1_ref, b1_ref, w2_ref, b2_ref, o_ref):
    # bf16 operands -> MXU, f32 accumulation.
    x = x_ref[...].astype(w1_ref.dtype)
    h = jnp.dot(x, w1_ref[...], preferred_element_type=jnp.float32)
    # f32 epilogue (bias + ReLU), single downcast before the second MXU pass.
    h = jnp.maximum(h + b1_ref[...], 0.0)
    out = jnp.dot(h.astype(w2_ref.dtype), w2_ref[...],
                  preferred_element_type=jnp.float32)
    o_ref[...] = (out + b2_ref[...]).astype(o_ref.dtype)


def prepare_mlp_params(w1, b1, w2, b2, *, compute_dtype=jnp.bfloat16):
    """One-time layout work (outside the hot path).

    w1: (hid, in)  b1: (hid,)  w2: (out, hid)  b2: (out,)  -- PyTorch layout.
    Returns transposed weights with the HIDDEN dim padded to the lane width
    (keeps the intermediate lane-dense); output columns are left unpadded so
    the kernel writes exactly (n, out_chs).
    """
    hid, in_chs = w1.shape
    out_chs = w2.shape[0]
    hid_pad = _round_up(hid, LANE)

    w1_p = jnp.zeros((in_chs, hid_pad), compute_dtype)
    w1_p = w1_p.at[:, :hid].set(w1.T.astype(compute_dtype))            # (in, hid_pad)
    b1_p = jnp.zeros((1, hid_pad), jnp.float32).at[:, :hid].set(b1.astype(jnp.float32))

    w2_p = jnp.zeros((hid_pad, out_chs), compute_dtype)
    w2_p = w2_p.at[:hid, :].set(w2.T.astype(compute_dtype))            # (hid_pad, out)
    b2_p = b2.astype(jnp.float32).reshape(1, out_chs)

    return w1_p, b1_p, w2_p, b2_p


def mlp_forward(x, w1_p, b1_p, w2_p, b2_p, *, tile_n=1024, out_dtype=jnp.float32):
    """x: (N, in_chs) f32/bf16. Returns (N, out_chs) in out_dtype."""
    n, in_chs = x.shape
    hid_pad = w1_p.shape[1]
    out_chs = w2_p.shape[1]

    # Row tile: multiple of 8 (sublanes), no bigger than the (rounded) batch.
    tile_n = max(8, min(tile_n, _round_up(n, 8)))
    # Keep >= 2 grid steps so the "parallel" axis can shard across v7x's 2 TCs
    # (weights are tiny, per-TC replication is free; harmless on 1-TC chips).
    if pl.cdiv(n, tile_n) < 2 and n > 8:
        tile_n = _round_up(pl.cdiv(n, 2), 8)
    grid = (pl.cdiv(n, tile_n),)

    xb = x.dtype.itemsize
    ob = jnp.dtype(out_dtype).itemsize

    # VMEM working set: double-buffered x/out tiles + resident weights +
    # f32 intermediate / accumulator / bf16 recast of h.
    block_bytes = (
        2 * tile_n * in_chs * xb            # x tile, double-buffered
        + 2 * tile_n * out_chs * ob         # out tile, double-buffered
        + w1_p.size * w1_p.dtype.itemsize
        + w2_p.size * w2_p.dtype.itemsize
        + b1_p.size * 4 + b2_p.size * 4
        + tile_n * hid_pad * 4              # h (f32)
        + tile_n * hid_pad * 2              # h downcast (bf16)
        + tile_n * out_chs * 4              # f32 accumulator before store
    )
    vmem_limit = int(min(max(2 * block_bytes, 16 * 1024 * 1024), 48 * 1024 * 1024))

    flops = 2 * n * (in_chs * hid_pad + hid_pad * out_chs)
    bytes_accessed = (
        n * in_chs * xb
        + w1_p.size * w1_p.dtype.itemsize
        + w2_p.size * w2_p.dtype.itemsize
        + b1_p.size * 4 + b2_p.size * 4
        + n * out_chs * ob
    )

    return pl.pallas_call(
        mlp_kernel,
        out_shape=jax.ShapeDtypeStruct((n, out_chs), out_dtype),
        grid_spec=pltpu.PrefetchScalarGridSpec(
            num_scalar_prefetch=0,
            grid=grid,
            in_specs=[
                pl.BlockSpec((tile_n, in_chs), lambda i: (i, 0)),    # x tile
                pl.BlockSpec((in_chs, hid_pad), lambda i: (0, 0)),   # W1 resident
                pl.BlockSpec((1, hid_pad), lambda i: (0, 0)),        # b1 resident
                pl.BlockSpec((hid_pad, out_chs), lambda i: (0, 0)),  # W2 resident
                pl.BlockSpec((1, out_chs), lambda i: (0, 0)),        # b2 resident
            ],
            out_specs=pl.BlockSpec((tile_n, out_chs), lambda i: (i, 0)),
        ),
        compiler_params=pltpu.CompilerParams(
            dimension_semantics=("parallel",),
            vmem_limit_bytes=vmem_limit,
        ),
        cost_estimate=pl.CostEstimate(
            flops=flops, transcendentals=0, bytes_accessed=bytes_accessed),
    )(x, w1_p, b1_p, w2_p, b2_p)


def mlp_reference(x, w1, b1, w2, b2):
    h = x @ w1.T + b1
    h = jnp.maximum(h, 0.0)
    return h @ w2.T + b2


if __name__ == "__main__":
    # Module config (depth=2 default): in_chs=32, hid_chs=64, out_chs=32
    in_chs, hid_chs, out_chs = 32, 64, 32
    n = 512  # batch of feature vectors; >= 2 grid steps are forced for v7x

    key = jax.random.PRNGKey(0)
    kx, kw1, kb1, kw2, kb2 = jax.random.split(key, 5)

    x = jax.random.normal(kx, (n, in_chs), dtype=jnp.float32)
    # PyTorch parameter shapes: (out_features, in_features)
    w1 = jax.random.normal(kw1, (hid_chs, in_chs), dtype=jnp.float32) * 0.1
    b1 = jax.random.normal(kb1, (hid_chs,), dtype=jnp.float32) * 0.1
    w2 = jax.random.normal(kw2, (out_chs, hid_chs), dtype=jnp.float32) * 0.1
    b2 = jax.random.normal(kb2, (out_chs,), dtype=jnp.float32) * 0.1

    # One-time layout / padding / bf16 cast of the parameters.
    w1_p, b1_p, w2_p, b2_p = prepare_mlp_params(w1, b1, w2, b2)

    fwd = jax.jit(partial(mlp_forward, tile_n=1024, out_dtype=jnp.float32))
    out = fwd(x, w1_p, b1_p, w2_p, b2_p)
    out = jax.block_until_ready(out)

    ref = mlp_reference(x, w1, b1, w2, b2)
    assert out.shape == (n, out_chs)
    # bf16 MXU operands -> loosened tolerance vs the f32 reference.
    assert jnp.allclose(out, ref, atol=5e-2, rtol=5e-2), "mismatch vs reference"

    print("KERNEL_OK")
</pallas_src>

<mosaic_0001>
module attributes {stable_mosaic.version = 11 : i64} {
  func.func @mlp_kernel(%arg0: i32, %arg1: memref<256x32xf32, #tpu.memory_space<vmem>>, %arg2: memref<32x128xbf16, #tpu.memory_space<vmem>>, %arg3: memref<1x128xf32, #tpu.memory_space<vmem>>, %arg4: memref<128x32xbf16, #tpu.memory_space<vmem>>, %arg5: memref<1x32xf32, #tpu.memory_space<vmem>>, %arg6: memref<256x32xf32, #tpu.memory_space<vmem>>) attributes {dimension_semantics = [#tpu.dimension_semantics<parallel>], iteration_bounds = array<i64: 2>, scalar_prefetch = 0 : i64, scratch_operands = 0 : i64, tpu.core_type = #tpu.core_type<tc>, window_params = [{transform_indices = @transform_0, window_bounds = array<i64: 256, 32>}, {pipeline_mode = #tpu.pipeline_mode<synchronous>, transform_indices = @transform_1, window_bounds = array<i64: 32, 128>}, {pipeline_mode = #tpu.pipeline_mode<synchronous>, transform_indices = @transform_2, window_bounds = array<i64: 1, 128>}, {pipeline_mode = #tpu.pipeline_mode<synchronous>, transform_indices = @transform_3, window_bounds = array<i64: 128, 32>}, {pipeline_mode = #tpu.pipeline_mode<synchronous>, transform_indices = @transform_4, window_bounds = array<i64: 1, 32>}, {transform_indices = @transform_5, window_bounds = array<i64: 256, 32>}]} {
    %c0 = arith.constant 0 : index
    %c0_0 = arith.constant 0 : index
    %0 = vector.load %arg1[%c0, %c0_0] : memref<256x32xf32, #tpu.memory_space<vmem>>, vector<256x32xf32>
    %1 = arith.truncf %0 : vector<256x32xf32> to vector<256x32xbf16>
    %c0_1 = arith.constant 0 : index
    %c0_2 = arith.constant 0 : index
    %2 = vector.load %arg2[%c0_1, %c0_2] : memref<32x128xbf16, #tpu.memory_space<vmem>>, vector<32x128xbf16>
    %cst = arith.constant dense<0.000000e+00> : vector<256x128xf32>
    %3 = tpu.matmul %1, %2, %cst {dimension_numbers = #tpu.dot_dimension_numbers<[1], [0], [0], [1], [0, 0, 1, 1], [], []>} : vector<256x32xbf16>, vector<32x128xbf16>, vector<256x128xf32> -> vector<256x128xf32>
    %c0_3 = arith.constant 0 : index
    %c0_4 = arith.constant 0 : index
    %4 = vector.load %arg3[%c0_3, %c0_4] : memref<1x128xf32, #tpu.memory_space<vmem>>, vector<1x128xf32>
    %5 = vector.broadcast %4 : vector<1x128xf32> to vector<256x128xf32>
    %6 = arith.addf %3, %5 : vector<256x128xf32>
    %cst_5 = arith.constant 0.000000e+00 : f32
    %7 = vector.broadcast %cst_5 : f32 to vector<256x128xf32>
    %8 = arith.maximumf %6, %7 : vector<256x128xf32>
    %9 = arith.truncf %8 : vector<256x128xf32> to vector<256x128xbf16>
    %c0_6 = arith.constant 0 : index
    %c0_7 = arith.constant 0 : index
    %10 = vector.load %arg4[%c0_6, %c0_7] : memref<128x32xbf16, #tpu.memory_space<vmem>>, vector<128x32xbf16>
    %cst_8 = arith.constant dense<0.000000e+00> : vector<256x32xf32>
    %11 = tpu.matmul %9, %10, %cst_8 {dimension_numbers = #tpu.dot_dimension_numbers<[1], [0], [0], [1], [0, 0, 1, 1], [], []>} : vector<256x128xbf16>, vector<128x32xbf16>, vector<256x32xf32> -> vector<256x32xf32>
    %c0_9 = arith.constant 0 : index
    %c0_10 = arith.constant 0 : index
    %12 = vector.load %arg5[%c0_9, %c0_10] : memref<1x32xf32, #tpu.memory_space<vmem>>, vector<1x32xf32>
    %13 = vector.broadcast %12 : vector<1x32xf32> to vector<256x32xf32>
    %14 = arith.addf %11, %13 : vector<256x32xf32>
    %c0_11 = arith.constant 0 : index
    %c0_12 = arith.constant 0 : index
    %15 = vector.load %arg6[%c0_11, %c0_12] : memref<256x32xf32, #tpu.memory_space<vmem>>, vector<256x32xf32>
    tpu.vector_store %arg6[%c0_11, %c0_12], %14 {strides = array<i32>} : memref<256x32xf32, #tpu.memory_space<vmem>>, vector<256x32xf32>,
    return
  }
  func.func @transform_0(%arg0: i32) -> (i32, i32) {
    %c0_i32 = arith.constant 0 : i32
    %c0_i32_0 = arith.constant 0 : i32
    return %arg0, %c0_i32 : i32, i32
  }
  func.func @transform_1(%arg0: i32) -> (i32, i32) {
    %c0_i32 = arith.constant 0 : i32
    %c0_i32_0 = arith.constant 0 : i32
    %c0_i32_1 = arith.constant 0 : i32
    return %c0_i32, %c0_i32_0 : i32, i32
  }
  func.func @transform_2(%arg0: i32) -> (i32, i32) {
    %c0_i32 = arith.constant 0 : i32
    %c0_i32_0 = arith.constant 0 : i32
    %c0_i32_1 = arith.constant 0 : i32
    return %c0_i32, %c0_i32_0 : i32, i32
  }
  func.func @transform_3(%arg0: i32) -> (i32, i32) {
    %c0_i32 = arith.constant 0 : i32
    %c0_i32_0 = arith.constant 0 : i32
    %c0_i32_1 = arith.constant 0 : i32
    return %c0_i32, %c0_i32_0 : i32, i32
  }
  func.func @transform_4(%arg0: i32) -> (i32, i32) {
    %c0_i32 = arith.constant 0 : i32
    %c0_i32_0 = arith.constant 0 : i32
    %c0_i32_1 = arith.constant 0 : i32
    return %c0_i32, %c0_i32_0 : i32, i32
  }
  func.func @transform_5(%arg0: i32) -> (i32, i32) {
    %c0_i32 = arith.constant 0 : i32
    %c0_i32_0 = arith.constant 0 : i32
    return %arg0, %c0_i32 : i32, i32
  }
}

</mosaic_0001>

<llo_original>
// kernel: mlp_forward.1
$region0: #{mlp_forward.1}
  #allocation0 [shape = 'u32[]', space=smem, size = 0x4, offset = 0x4, fixed_abs, tag = 'smem constant byte address 0x4 - core index']
  #allocation1 [shape = 'u32[144,128]{1,0:T(1,128)}', space=vmem, size = 0x12000, scoped, tag = 'internal scratch']
  %s0 = inlined_call_operand.vmem [shape: f32[512,32], index: 0, kind: input, shape index: {}]
  %s1 = inlined_call_operand.vmem [shape: bf16[32,128], index: 1, kind: input, shape index: {}]
  %s2 = inlined_call_operand.vmem [shape: f32[1,128], index: 2, kind: input, shape index: {}]
  %s3 = inlined_call_operand.vmem [shape: bf16[128,32], index: 3, kind: input, shape index: {}]
  %s4 = inlined_call_operand.vmem [shape: f32[1,32], index: 4, kind: input, shape index: {}]
  %s5 = inlined_call_operand.vmem [shape: f32[512,32], index: 5, kind: output, shape index: {}]
  %s6 = sld [smem:[#allocation0]]
  $region53: #{mlp_forward.1} parent=0
    _
  %s8 = ssub.s32 1, %s6
  %s9 = scalar_select 0, %s8, %s6
  loop: start=0, step=1, limit=4
  $region2: #{mlp_forward.1} parent=0 // loop_pre_header
    _
  $region3: #{mlp_forward.1} parent=0 // loop_header
    %s11 = sphi 0, %s15
    %p12 = scmp.ge.s32.totalorder %s11, 4
    %s21 = sphi 0, %s23
    %s24 = sphi 0, %s21
    %s25 = sphi 0, %s24
    %s41 = sphi 0, %s25
    %s45 = sphi 0, %s45
    %s47 = sphi 0, %s45
    %s48 = sphi 0, %s47
    %s62 = sphi 0, %s48
    %s66 = sphi 0, %s66
    %s68 = sphi 0, %s66
    %s69 = sphi 0, %s68
    %s83 = sphi 0, %s69
    %s87 = sphi 0, %s87
    %s89 = sphi 0, %s87
    %s90 = sphi 0, %s89
    %s104 = sphi 0, %s90
    %s108 = sphi 0, %s108
    %s110 = sphi 0, %s108
    %s111 = sphi 0, %s110
    %s125 = sphi 0, %s111
    %s131 = sphi 0, %s133
    %s134 = sphi 0, %s131
    %s135 = sphi 0, %s134
    %s151 = sphi 0, %s135
  $region4: #{mlp_forward.1} parent=0 // loop_header_branch
    %14 = sbr.rel (%p12) target = $region8
  $region5: #{mlp_forward.1} parent=0 // loop_body
    %s16 = ssub.s32 %s11, 1
    %s17 = ssub.s32 %s11, 2
    %s18 = sadd.s32 %s11, 1
    %s19 = ssub.s32 %s11, %s18
    %p20 = scmp.eq.s32.totalorder %s19, 0
    %s22 = sadd.s32 %s21, 1
    %s23 = scalar_select %p20, %s21, %s22
    %p26 = pneg %p20
    %p27 = scmp.eq.s32.totalorder %s11, 1
    %p28 = por %p26, %p27
    %p29 = scmp.ne.s32.totalorder %s21, %s24
    %p30 = scmp.eq.s32.totalorder %s11, 0
    %p31 = por %p29, %p30
    %p32 = scmp.ne.s32.totalorder %s21, %s24
    %p33 = scmp.eq.s32.totalorder %s16, 1
    %p34 = por %p32, %p33
    %p35 = scmp.ne.s32.totalorder %s24, %s25
    %p36 = scmp.eq.s32.totalorder %s16, 0
    %p37 = por %p35, %p36
    %p38 = scmp.ne.s32.totalorder %s24, %s25
    %p39 = scmp.eq.s32.totalorder %s17, 1
    %p40 = por %p38, %p39
    %p42 = scmp.ne.s32.totalorder %s25, %s41
    %p43 = scmp.eq.s32.totalorder %s17, 0
    %p44 = por %p42, %p43
    %s46 = sadd.s32 %s45, 1
    %p49 = scmp.eq.s32.totalorder %s11, 1
    %p50 = scmp.ne.s32.totalorder %s45, %s47
    %p51 = scmp.eq.s32.totalorder %s11, 0
    %p52 = por %p50, %p51
    %p53 = scmp.ne.s32.totalorder %s45, %s47
    %p54 = scmp.eq.s32.totalorder %s16, 1
    %p55 = por %p53, %p54
    %p56 = scmp.ne.s32.totalorder %s47, %s48
    %p57 = scmp.eq.s32.totalorder %s16, 0
    %p58 = por %p56, %p57
    %p59 = scmp.ne.s32.totalorder %s47, %s48
    %p60 = scmp.eq.s32.totalorder %s17, 1
    %p61 = por %p59, %p60
    %p63 = scmp.ne.s32.totalorder %s48, %s62
    %p64 = scmp.eq.s32.totalorder %s17, 0
    %p65 = por %p63, %p64
    %s67 = sadd.s32 %s66, 1
    %p70 = scmp.eq.s32.totalorder %s11, 1
    %p71 = scmp.ne.s32.totalorder %s66, %s68
    %p72 = scmp.eq.s32.totalorder %s11, 0
    %p73 = por %p71, %p72
    %p74 = scmp.ne.s32.totalorder %s66, %s68
    %p75 = scmp.eq.s32.totalorder %s16, 1
    %p76 = por %p74, %p75
    %p77 = scmp.ne.s32.totalorder %s68, %s69
    %p78 = scmp.eq.s32.totalorder %s16, 0
    %p79 = por %p77, %p78
    %p80 = scmp.ne.s32.totalorder %s68, %s69
    %p81 = scmp.eq.s32.totalorder %s17, 1
    %p82 = por %p80, %p81
    %p84 = scmp.ne.s32.totalorder %s69, %s83
    %p85 = scmp.eq.s32.totalorder %s17, 0
    %p86 = por %p84, %p85
    %s88 = sadd.s32 %s87, 1
    %p91 = scmp.eq.s32.totalorder %s11, 1
    %p92 = scmp.ne.s32.totalorder %s87, %s89
    %p93 = scmp.eq.s32.totalorder %s11, 0
    %p94 = por %p92, %p93
    %p95 = scmp.ne.s32.totalorder %s87, %s89
    %p96 = scmp.eq.s32.totalorder %s16, 1
    %p97 = por %p95, %p96
    %p98 = scmp.ne.s32.totalorder %s89, %s90
    %p99 = scmp.eq.s32.totalorder %s16, 0
    %p100 = por %p98, %p99
    %p101 = scmp.ne.s32.totalorder %s89, %s90
    %p102 = scmp.eq.s32.totalorder %s17, 1
    %p103 = por %p101, %p102
    %p105 = scmp.ne.s32.totalorder %s90, %s104
    %p106 = scmp.eq.s32.totalorder %s17, 0
    %p107 = por %p105, %p106
    %s109 = sadd.s32 %s108, 1
    %p112 = scmp.eq.s32.totalorder %s11, 1
    %p113 = scmp.ne.s32.totalorder %s108, %s110
    %p114 = scmp.eq.s32.totalorder %s11, 0
    %p115 = por %p113, %p114
    %p116 = scmp.ne.s32.totalorder %s108, %s110
    %p117 = scmp.eq.s32.totalorder %s16, 1
    %p118 = por %p116, %p117
    %p119 = scmp.ne.s32.totalorder %s110, %s111
    %p120 = scmp.eq.s32.totalorder %s16, 0
    %p121 = por %p119, %p120
    %p122 = scmp.ne.s32.totalorder %s110, %s111
    %p123 = scmp.eq.s32.totalorder %s17, 1
    %p124 = por %p122, %p123
    %p126 = scmp.ne.s32.totalorder %s111, %s125
    %p127 = scmp.eq.s32.totalorder %s17, 0
    %p128 = por %p126, %p127
    %s129 = ssub.s32 %s11, %s18
    %p130 = scmp.eq.s32.totalorder %s129, 0
    %s132 = sadd.s32 %s131, 1
    %s133 = scalar_select %p130, %s131, %s132
    %p136 = pneg %p130
    %p137 = scmp.eq.s32.totalorder %s11, 1
    %p138 = por %p136, %p137
    %p139 = scmp.ne.s32.totalorder %s131, %s134
    %p140 = scmp.eq.s32.totalorder %s11, 0
    %p141 = por %p139, %p140
    %p142 = scmp.ne.s32.totalorder %s131, %s134
    %p143 = scmp.eq.s32.totalorder %s16, 1
    %p144 = por %p142, %p143
    %p145 = scmp.ne.s32.totalorder %s134, %s135
    %p146 = scmp.eq.s32.totalorder %s16, 0
    %p147 = por %p145, %p146
    %p148 = scmp.ne.s32.totalorder %s134, %s135
    %p149 = scmp.eq.s32.totalorder %s17, 1
    %p150 = por %p148, %p149
    %p152 = scmp.ne.s32.totalorder %s135, %s151
    %p153 = scmp.eq.s32.totalorder %s17, 0
    %p154 = por %p152, %p153
    %p155 = scmp.le.s32.totalorder 1, %s11
    %p156 = scmp.lt.s32.totalorder %s11, 3
    %p157 = pnand %p155, %p156
    %p158 = pneg %p157
    // Predicated region
    $region9: #{mlp_forward.1} parent=5 // pred_check
      _
    $region10: #{mlp_forward.1} parent=5 // pred_check_branch
      %160 = sbr.rel (%p157) target = $region12
    $region11: #{mlp_forward.1} parent=5 // pred_region
      %s161 = ssub.s32 %s11, 1
      // Predicated region
      $region13: #{mlp_forward.1} parent=11 // pred_check
        %p162 = pneg %p58
      $region14: #{mlp_forward.1} parent=11 // pred_check_branch
        %164 = sbr.rel (%p162) target = $region16
      $region15: #{mlp_forward.1} parent=11 // pred_region
        _
      $region16: #{mlp_forward.1} parent=11 // pred_fallthru
        _
      // Predicated region
      $region17: #{mlp_forward.1} parent=11 // pred_check
        %p165 = pneg %p79
      $region18: #{mlp_forward.1} parent=11 // pred_check_branch
        %167 = sbr.rel (%p165) target = $region20
      $region19: #{mlp_forward.1} parent=11 // pred_region
        _
      $region20: #{mlp_forward.1} parent=11 // pred_fallthru
        _
      // Predicated region
      $region21: #{mlp_forward.1} parent=11 // pred_check
        %p168 = pneg %p100
      $region22: #{mlp_forward.1} parent=11 // pred_check_branch
        %170 = sbr.rel (%p168) target = $region24
      $region23: #{mlp_forward.1} parent=11 // pred_region
        _
      $region24: #{mlp_forward.1} parent=11 // pred_fallthru
        _
      // Predicated region
      $region25: #{mlp_forward.1} parent=11 // pred_check
        %p171 = pneg %p121
      $region26: #{mlp_forward.1} parent=11 // pred_check_branch
        %173 = sbr.rel (%p171) target = $region28
      $region27: #{mlp_forward.1} parent=11 // pred_region
        _
      $region28: #{mlp_forward.1} parent=11 // pred_fallthru
        _
    $region12: #{mlp_forward.1} parent=5 // pred_fallthru
      _
    %p174 = scmp.lt.s32.totalorder %s11, 2
    // Predicated region
    $region29: #{mlp_forward.1} parent=5 // pred_check
      %p175 = pneg %p174
    $region30: #{mlp_forward.1} parent=5 // pred_check_branch
      %177 = sbr.rel (%p175) target = $region32
    $region31: #{mlp_forward.1} parent=5 // pred_region
      // Predicated region
      $region33: #{mlp_forward.1} parent=31 // pred_check
        %p178 = pneg %p31
      $region34: #{mlp_forward.1} parent=31 // pred_check_branch
        %180 = sbr.rel (%p178) target = $region36
      $region35: #{mlp_forward.1} parent=31 // pred_region
        %s181 = smul.u32 32, %s11
        %p182 = scmp.lt.s32.totalorder %s181, 63
        %s183 = scalar_select %p182, %s181, 63
        %s184 = smul.addr %s183, 8
        %s185 = scalar_lea.vmem %s0, %s184
        %s186 = smul.u32 32, %s11
      $region36: #{mlp_forward.1} parent=31 // pred_fallthru
        _
    $region32: #{mlp_forward.1} parent=5 // pred_fallthru
      _
    %p187 = scmp.le.s32.totalorder 1, %s11
    %p188 = scmp.lt.s32.totalorder %s11, 3
    %p189 = pnand %p187, %p188
    %p190 = pneg %p189
    // Predicated region
    $region37: #{mlp_forward.1} parent=5 // pred_check
      _
    $region38: #{mlp_forward.1} parent=5 // pred_check_branch
      %192 = sbr.rel (%p189) target = $region40
    $region39: #{mlp_forward.1} parent=5 // pred_region
      %s193 = ssub.s32 %s11, 1
      %s194 = smul.u32 32, %s16
      %p195 = scmp.lt.s32.totalorder %s194, 63
      %s196 = scalar_select %p195, %s194, 63
      %s197 = smul.addr %s196, 8
      %s198 = scalar_lea.vmem %s0, %s197
      %p199 = pneg %p37
      %p200 = pneg %p34
      %p201 = pneg %p58
      %p202 = pneg %p55
      %p203 = pneg %p79
      %p204 = pneg %p76
      %p205 = pneg %p100
      %p206 = pneg %p97
      %p207 = pneg %p121
      %p208 = pneg %p118
      %p209 = pneg %p147
      %p210 = pneg %p144
      %s211 = smul.u32 32, %s16
      %p212 = scmp.lt.s32.totalorder %s211, 63
      %s213 = scalar_select %p212, %s211, 63
      %s214 = smul.addr %s213, 8
      %s215 = scalar_lea.vmem %s5, %s214
      %s216 = smul.u32 32, %s16
      %p217 = scmp.lt.s32.totalorder %s216, 63
      %s218 = scalar_select %p217, %s216, 63
      %s219 = smul.addr %s218, 8
      %s220 = scalar_lea.vmem %s0, %s219
      %s221 = smul.u32 32, %s16
      %s222 = smul.u32 32, %s16
      %p223 = scmp.lt.s32.totalorder %s222, 63
      %s224 = scalar_select %p223, %s222, 63
      %s225 = smul.addr %s224, 8
      %s226 = scalar_lea.vmem %s5, %s225
      %s227 = smul.u32 32, %s16
      %v229 = vld [vmem:[%s220] sm:$0xff]
      %v230 = vld [vmem:[%s220 + $0x8] sm:$0xff]
      %v231 = vld [vmem:[%s220 + $0x10] sm:$0xff]
      %v232 = vld [vmem:[%s220 + $0x18] sm:$0xff]
      %v233 = vld [vmem:[%s220 + $0x20] sm:$0xff]
      %v234 = vld [vmem:[%s220 + $0x28] sm:$0xff]
      %v235 = vld [vmem:[%s220 + $0x30] sm:$0xff]
      %v236 = vld [vmem:[%s220 + $0x38] sm:$0xff]
      %v237 = vld [vmem:[%s220 + $0x40] sm:$0xff]
      %v238 = vld [vmem:[%s220 + $0x48] sm:$0xff]
      %v239 = vld [vmem:[%s220 + $0x50] sm:$0xff]
      %v240 = vld [vmem:[%s220 + $0x58] sm:$0xff]
      %v241 = vld [vmem:[%s220 + $0x60] sm:$0xff]
      %v242 = vld [vmem:[%s220 + $0x68] sm:$0xff]
      %v243 = vld [vmem:[%s220 + $0x70] sm:$0xff]
      %v244 = vld [vmem:[%s220 + $0x78] sm:$0xff]
      %v245 = vld [vmem:[%s220 + $0x80] sm:$0xff]
      %v246 = vld [vmem:[%s220 + $0x88] sm:$0xff]
      %v247 = vld [vmem:[%s220 + $0x90] sm:$0xff]
      %v248 = vld [vmem:[%s220 + $0x98] sm:$0xff]
      %v249 = vld [vmem:[%s220 + $0xa0] sm:$0xff]
      %v250 = vld [vmem:[%s220 + $0xa8] sm:$0xff]
      %v251 = vld [vmem:[%s220 + $0xb0] sm:$0xff]
      %v252 = vld [vmem:[%s220 + $0xb8] sm:$0xff]
      %v253 = vld [vmem:[%s220 + $0xc0] sm:$0xff]
      %v254 = vld [vmem:[%s220 + $0xc8] sm:$0xff]
      %v255 = vld [vmem:[%s220 + $0xd0] sm:$0xff]
      %v256 = vld [vmem:[%s220 + $0xd8] sm:$0xff]
      %v257 = vld [vmem:[%s220 + $0xe0] sm:$0xff]
      %v258 = vld [vmem:[%s220 + $0xe8] sm:$0xff]
      %v259 = vld [vmem:[%s220 + $0xf0] sm:$0xff]
      %v260 = vld [vmem:[%s220 + $0xf8] sm:$0xff]
      %v261 = vpack.c.bf16 %v230, %v229
      %v262 = vpack.c.bf16 %v232, %v231
      %v263 = vpack.c.bf16 %v234, %v233
      %v264 = vpack.c.bf16 %v236, %v235
      %v265 = vpack.c.bf16 %v238, %v237
      %v266 = vpack.c.bf16 %v240, %v239
      %v267 = vpack.c.bf16 %v242, %v241
      %v268 = vpack.c.bf16 %v244, %v243
      %v269 = vpack.c.bf16 %v246, %v245
      %v270 = vpack.c.bf16 %v248, %v247
      %v271 = vpack.c.bf16 %v250, %v249
      %v272 = vpack.c.bf16 %v252, %v251
      %v273 = vpack.c.bf16 %v254, %v253
      %v274 = vpack.c.bf16 %v256, %v255
      %v275 = vpack.c.bf16 %v258, %v257
      %v276 = vpack.c.bf16 %v260, %v259
      %v277 = vld [vmem:[%s1] sm:$0xf]
      %v278 = vld [vmem:[%s1 + $0x4] sm:$0xf]
      %v279 = vld [vmem:[%s1 + $0x8] sm:$0xf]
      %v280 = vld [vmem:[%s1 + $0xc] sm:$0xf]
      %v281 = vld [vmem:[%s2] sm:$0x1]
      %v283 = vlaneseq
      %v284 = vshrl.u32 %v283, 7
      %v285 = vsub.s32 0, %v284
      %v286 = vrot.slane %v281, %v285
      %v292 = vunpack.c.l.b16 %v277
      %v293 = vunpack.c.l.b16 %v278
      %v294 = vunpack.c.l.b16 %v279
      %v295 = vunpack.c.l.b16 %v280
      %v296 = vpack.c.b16 %v293, %v292
      %v297 = vpack.c.b16 %v295, %v294
      %vm300 = vcmask 261120
      %v302 = vsel %vm300, %v261, 0
      %v305 = vsel %vm300, %v262, 0
      %v308 = vsel %vm300, %v263, 0
      %v311 = vsel %vm300, %v264, 0
      %v314 = vsel %vm300, %v265, 0
      %v317 = vsel %vm300, %v266, 0
      %v320 = vsel %vm300, %v267, 0
      %v323 = vsel %vm300, %v268, 0
      %v326 = vsel %vm300, %v269, 0
      %v329 = vsel %vm300, %v270, 0
      %v332 = vsel %vm300, %v271, 0
      %v335 = vsel %vm300, %v272, 0
      %v338 = vsel %vm300, %v273, 0
      %v341 = vsel %vm300, %v274, 0
      %v344 = vsel %vm300, %v275, 0
      %v347 = vsel %vm300, %v276, 0
      %349 = vmatprep.subr.bf16.mxu0 0
      %350 = vmatpush1.bf16.msra.mxu0 %v296
      %351 = vmatprep.subr.bf16.mxu0 0
      %352 = vmatpush1.bf16.msra.mxu0 %v297
      %353 = vmatprep.subr.bf16.mxu0 0
      %354 = vmatpush1.bf16.msra.mxu0 0
      %355 = vmatprep.subr.bf16.mxu0 0
      %356 = vmatpush1.bf16.msra.mxu0 0
      %357 = vmatprep.subr.bf16.mxu0 0
      %358 = vmatpush1.bf16.msra.mxu0 0
      %359 = vmatprep.subr.bf16.mxu0 0
      %360 = vmatpush1.bf16.msra.mxu0 0
      %361 = vmatprep.subr.bf16.mxu0 0
      %362 = vmatpush1.bf16.msra.mxu0 0
      %363 = vmatprep.subr.bf16.mxu0 0
      %364 = vmatpush1.bf16.msra.mxu0 0
      %365 = vmatprep.subr.bf16.mxu0 0
      %366 = vmatpush1.bf16.msra.mxu0 0
      %367 = vmatprep.subr.bf16.mxu0 0
      %368 = vmatpush1.bf16.msra.mxu0 0
      %369 = vmatprep.subr.bf16.mxu0 0
      %370 = vmatpush1.bf16.msra.mxu0 0
      %371 = vmatprep.subr.bf16.mxu0 0
      %372 = vmatpush1.bf16.msra.mxu0 0
      %373 = vmatprep.subr.bf16.mxu0 0
      %374 = vmatpush1.bf16.msra.mxu0 0
      %375 = vmatprep.subr.bf16.mxu0 0
      %376 = vmatpush1.bf16.msra.mxu0 0
      %377 = vmatprep.subr.bf16.mxu0 0
      %378 = vmatpush1.bf16.msra.mxu0 0
      %379 = vmatprep.subr.bf16.mxu0 0
      %380 = vmatpush1.bf16.msra.mxu0 0
      %381 = vmatprep.mubr.bf16.mxu0 0
      %382 = vmatmul.mubr.bf16.gmra.mrb[0].mxu0 %v302
      %v383 = vpop.f32.mrb[0].mxu0
      %v384 = vadd.f32 %v286, %v383
      %v385 = vpop.f32.mrb[0].mxu0
      %v386 = vpop.f32.mrb[0].mxu0
      %v387 = vadd.f32 %v286, %v386
      %v388 = vpop.f32.mrb[0].mxu0
      %389 = vmatprep.mubr.bf16.mxu0 0
      %390 = vmatmul.mubr.bf16.gmra.mrb[0].mxu0 %v305
      %v391 = vpop.f32.mrb[0].mxu0
      %v392 = vadd.f32 %v286, %v391
      %v393 = vpop.f32.mrb[0].mxu0
      %v394 = vpop.f32.mrb[0].mxu0
      %v395 = vadd.f32 %v286, %v394
      %v396 = vpop.f32.mrb[0].mxu0
      %397 = vmatprep.mubr.bf16.mxu0 0
      %398 = vmatmul.mubr.bf16.gmra.mrb[0].mxu0 %v308
      %v399 = vpop.f32.mrb[0].mxu0
      %v400 = vadd.f32 %v286, %v399
      %v401 = vpop.f32.mrb[0].mxu0
      %v402 = vpop.f32.mrb[0].mxu0
      %v403 = vadd.f32 %v286, %v402
      %v404 = vpop.f32.mrb[0].mxu0
      %405 = vmatprep.mubr.bf16.mxu0 0
      %406 = vmatmul.mubr.bf16.gmra.mrb[0].mxu0 %v311
      %v407 = vpop.f32.mrb[0].mxu0
      %v408 = vadd.f32 %v286, %v407
      %v409 = vpop.f32.mrb[0].mxu0
      %v410 = vpop.f32.mrb[0].mxu0
      %v411 = vadd.f32 %v286, %v410
      %v412 = vpop.f32.mrb[0].mxu0
      %413 = vmatprep.mubr.bf16.mxu0 0
      %414 = vmatmul.mubr.bf16.gmra.mrb[0].mxu0 %v314
      %v415 = vpop.f32.mrb[0].mxu0
      %v416 = vadd.f32 %v286, %v415
      %v417 = vpop.f32.mrb[0].mxu0
      %v418 = vpop.f32.mrb[0].mxu0
      %v419 = vadd.f32 %v286, %v418
      %v420 = vpop.f32.mrb[0].mxu0
      %421 = vmatprep.mubr.bf16.mxu0 0
      %422 = vmatmul.mubr.bf16.gmra.mrb[0].mxu0 %v317
      %v423 = vpop.f32.mrb[0].mxu0
      %v424 = vadd.f32 %v286, %v423
      %v425 = vpop.f32.mrb[0].mxu0
      %v426 = vpop.f32.mrb[0].mxu0
      %v427 = vadd.f32 %v286, %v426
      %v428 = vpop.f32.mrb[0].mxu0
      %429 = vmatprep.mubr.bf16.mxu0 0
      %430 = vmatmul.mubr.bf16.gmra.mrb[0].mxu0 %v320
      %v431 = vpop.f32.mrb[0].mxu0
      %v432 = vadd.f32 %v286, %v431
      %v433 = vpop.f32.mrb[0].mxu0
      %v434 = vpop.f32.mrb[0].mxu0
      %v435 = vadd.f32 %v286, %v434
      %v436 = vpop.f32.mrb[0].mxu0
      %437 = vmatprep.mubr.bf16.mxu0 0
      %438 = vmatmul.mubr.bf16.gmra.mrb[0].mxu0 %v323
      %v439 = vpop.f32.mrb[0].mxu0
      %v440 = vadd.f32 %v286, %v439
      %v441 = vpop.f32.mrb[0].mxu0
      %v442 = vpop.f32.mrb[0].mxu0
      %v443 = vadd.f32 %v286, %v442
      %v444 = vpop.f32.mrb[0].mxu0
      %445 = vmatprep.mubr.bf16.mxu0 0
      %446 = vmatmul.mubr.bf16.gmra.mrb[0].mxu0 %v326
      %v447 = vpop.f32.mrb[0].mxu0
      %v448 = vadd.f32 %v286, %v447
      %v449 = vpop.f32.mrb[0].mxu0
      %v450 = vpop.f32.mrb[0].mxu0
      %v451 = vadd.f32 %v286, %v450
      %v452 = vpop.f32.mrb[0].mxu0
      %453 = vmatprep.mubr.bf16.mxu0 0
      %454 = vmatmul.mubr.bf16.gmra.mrb[0].mxu0 %v329
      %v455 = vpop.f32.mrb[0].mxu0
      %v456 = vadd.f32 %v286, %v455
      %v457 = vpop.f32.mrb[0].mxu0
      %v458 = vpop.f32.mrb[0].mxu0
      %v459 = vadd.f32 %v286, %v458
      %v460 = vpop.f32.mrb[0].mxu0
      %461 = vmatprep.mubr.bf16.mxu0 0
      %462 = vmatmul.mubr.bf16.gmra.mrb[0].mxu0 %v332
      %v463 = vpop.f32.mrb[0].mxu0
      %v464 = vadd.f32 %v286, %v463
      %v465 = vpop.f32.mrb[0].mxu0
      %v466 = vpop.f32.mrb[0].mxu0
      %v467 = vadd.f32 %v286, %v466
      %v468 = vpop.f32.mrb[0].mxu0
      %469 = vmatprep.mubr.bf16.mxu0 0
      %470 = vmatmul.mubr.bf16.gmra.mrb[0].mxu0 %v335
      %v471 = vpop.f32.mrb[0].mxu0
      %v472 = vadd.f32 %v286, %v471
      %v473 = vpop.f32.mrb[0].mxu0
      %v474 = vpop.f32.mrb[0].mxu0
      %v475 = vadd.f32 %v286, %v474
      %v476 = vpop.f32.mrb[0].mxu0
      %477 = vmatprep.mubr.bf16.mxu0 0
      %478 = vmatmul.mubr.bf16.gmra.mrb[0].mxu0 %v338
      %v479 = vpop.f32.mrb[0].mxu0
      %v480 = vadd.f32 %v286, %v479
      %v481 = vpop.f32.mrb[0].mxu0
      %v482 = vpop.f32.mrb[0].mxu0
      %v483 = vadd.f32 %v286, %v482
      %v484 = vpop.f32.mrb[0].mxu0
      %485 = vmatprep.mubr.bf16.mxu0 0
      %486 = vmatmul.mubr.bf16.gmra.mrb[0].mxu0 %v341
      %v487 = vpop.f32.mrb[0].mxu0
      %v488 = vadd.f32 %v286, %v487
      %v489 = vpop.f32.mrb[0].mxu0
      %v490 = vpop.f32.mrb[0].mxu0
      %v491 = vadd.f32 %v286, %v490
      %v492 = vpop.f32.mrb[0].mxu0
      %493 = vmatprep.mubr.bf16.mxu0 0
      %494 = vmatmul.mubr.bf16.gmra.mrb[0].mxu0 %v344
      %v495 = vpop.f32.mrb[0].mxu0
      %v496 = vadd.f32 %v286, %v495
      %v497 = vpop.f32.mrb[0].mxu0
      %v498 = vpop.f32.mrb[0].mxu0
      %v499 = vadd.f32 %v286, %v498
      %v500 = vpop.f32.mrb[0].mxu0
      %501 = vmatprep.mubr.bf16.mxu0 0
      %502 = vmatmul.mubr.bf16.gmra.mrb[0].mxu0 %v347
      %v503 = vpop.f32.mrb[0].mxu0
      %v504 = vadd.f32 %v286, %v503
      %v505 = vpop.f32.mrb[0].mxu0
      %v506 = vpop.f32.mrb[0].mxu0
      %v507 = vadd.f32 %v286, %v506
      %v508 = vpop.f32.mrb[0].mxu0
      %509 = vdwg.mxu0
      %v510 = vmax.f32 %v384, 0.0
      %v511 = vmax.f32 %v387, 0.0
      %v512 = vmax.f32 %v392, 0.0
      %v513 = vmax.f32 %v395, 0.0
      %v514 = vmax.f32 %v400, 0.0
      %v515 = vmax.f32 %v403, 0.0
      %v516 = vmax.f32 %v408, 0.0
      %v517 = vmax.f32 %v411, 0.0
      %v518 = vmax.f32 %v416, 0.0
      %v519 = vmax.f32 %v419, 0.0
      %v520 = vmax.f32 %v424, 0.0
      %v521 = vmax.f32 %v427, 0.0
      %v522 = vmax.f32 %v432, 0.0
      %v523 = vmax.f32 %v435, 0.0
      %v524 = vmax.f32 %v440, 0.0
      %v525 = vmax.f32 %v443, 0.0
      %v526 = vmax.f32 %v448, 0.0
      %v527 = vmax.f32 %v451, 0.0
      %v528 = vmax.f32 %v456, 0.0
      %v529 = vmax.f32 %v459, 0.0
      %v530 = vmax.f32 %v464, 0.0
      %v531 = vmax.f32 %v467, 0.0
      %v532 = vmax.f32 %v472, 0.0
      %v533 = vmax.f32 %v475, 0.0
      %v534 = vmax.f32 %v480, 0.0
      %v535 = vmax.f32 %v483, 0.0
      %v536 = vmax.f32 %v488, 0.0
      %v537 = vmax.f32 %v491, 0.0
      %v538 = vmax.f32 %v496, 0.0
      %v539 = vmax.f32 %v499, 0.0
      %v540 = vmax.f32 %v504, 0.0
      %v541 = vmax.f32 %v507, 0.0
      %v542 = vpack.c.bf16 %v511, %v510
      %v543 = vpack.c.bf16 %v513, %v512
      %v544 = vpack.c.bf16 %v515, %v514
      %v545 = vpack.c.bf16 %v517, %v516
      %v546 = vpack.c.bf16 %v519, %v518
      %v547 = vpack.c.bf16 %v521, %v520
      %v548 = vpack.c.bf16 %v523, %v522
      %v549 = vpack.c.bf16 %v525, %v524
      %v550 = vpack.c.bf16 %v527, %v526
      %v551 = vpack.c.bf16 %v529, %v528
      %v552 = vpack.c.bf16 %v531, %v530
      %v553 = vpack.c.bf16 %v533, %v532
      %v554 = vpack.c.bf16 %v535, %v534
      %v555 = vpack.c.bf16 %v537, %v536
      %v556 = vpack.c.bf16 %v539, %v538
      %v557 = vpack.c.bf16 %v541, %v540
      %v558 = vld [vmem:[%s3] sm:$0xf]
      %v559 = vld [vmem:[%s3 + $0x4] sm:$0xf]
      %v560 = vld [vmem:[%s3 + $0x8] sm:$0xf]
      %v561 = vld [vmem:[%s3 + $0xc] sm:$0xf]
      %v562 = vld [vmem:[%s3 + $0x10] sm:$0xf]
      %v563 = vld [vmem:[%s3 + $0x14] sm:$0xf]
      %v564 = vld [vmem:[%s3 + $0x18] sm:$0xf]
      %v565 = vld [vmem:[%s3 + $0x1c] sm:$0xf]
      %v566 = vld [vmem:[%s3 + $0x20] sm:$0xf]
      %v567 = vld [vmem:[%s3 + $0x24] sm:$0xf]
      %v568 = vld [vmem:[%s3 + $0x28] sm:$0xf]
      %v569 = vld [vmem:[%s3 + $0x2c] sm:$0xf]
      %v570 = vld [vmem:[%s3 + $0x30] sm:$0xf]
      %v571 = vld [vmem:[%s3 + $0x34] sm:$0xf]
      %v572 = vld [vmem:[%s3 + $0x38] sm:$0xf]
      %v573 = vld [vmem:[%s3 + $0x3c] sm:$0xf]
      %v574 = vld [vmem:[%s4] sm:$0x1]
      %v576 = vlaneseq
      %v577 = vshrl.u32 %v576, 7
      %v578 = vsub.s32 0, %v577
      %v579 = vrot.slane %v574, %v578
      %v597 = vunpack.c.l.b16 %v558
      %v598 = vunpack.c.l.b16 %v559
      %v599 = vunpack.c.l.b16 %v560
      %v600 = vunpack.c.l.b16 %v561
      %v601 = vunpack.c.l.b16 %v562
      %v602 = vunpack.c.l.b16 %v563
      %v603 = vunpack.c.l.b16 %v564
      %v604 = vunpack.c.l.b16 %v565
      %v605 = vunpack.c.l.b16 %v566
      %v606 = vunpack.c.l.b16 %v567
      %v607 = vunpack.c.l.b16 %v568
      %v608 = vunpack.c.l.b16 %v569
      %v609 = vunpack.c.l.b16 %v570
      %v610 = vunpack.c.l.b16 %v571
      %v611 = vunpack.c.l.b16 %v572
      %v612 = vunpack.c.l.b16 %v573
      %v613 = vpack.c.b16 %v598, %v597
      %v614 = vpack.c.b16 %v600, %v599
      %v615 = vpack.c.b16 %v602, %v601
      %v616 = vpack.c.b16 %v604, %v603
      %v617 = vpack.c.b16 %v606, %v605
      %v618 = vpack.c.b16 %v608, %v607
      %v619 = vpack.c.b16 %v610, %v609
      %v620 = vpack.c.b16 %v612, %v611
      %629 = vmatprep.subr.bf16.mxu0 0
      %630 = vmatpush1.bf16.msra.mxu0 %v613
      %631 = vmatprep.subr.bf16.mxu0 0
      %632 = vmatpush1.bf16.msra.mxu0 %v614
      %633 = vmatprep.subr.bf16.mxu0 0
      %634 = vmatpush1.bf16.msra.mxu0 %v615
      %635 = vmatprep.subr.bf16.mxu0 0
      %636 = vmatpush1.bf16.msra.mxu0 %v616
      %637 = vmatprep.subr.bf16.mxu0 0
      %638 = vmatpush1.bf16.msra.mxu0 %v617
      %639 = vmatprep.subr.bf16.mxu0 0
      %640 = vmatpush1.bf16.msra.mxu0 %v618
      %641 = vmatprep.subr.bf16.mxu0 0
      %642 = vmatpush1.bf16.msra.mxu0 %v619
      %643 = vmatprep.subr.bf16.mxu0 0
      %644 = vmatpush1.bf16.msra.mxu0 %v620
      %645 = vmatprep.subr.bf16.mxu0 0
      %646 = vmatpush1.bf16.msra.mxu0 0
      %647 = vmatprep.subr.bf16.mxu0 0
      %648 = vmatpush1.bf16.msra.mxu0 0
      %649 = vmatprep.subr.bf16.mxu0 0
      %650 = vmatpush1.bf16.msra.mxu0 0
      %651 = vmatprep.subr.bf16.mxu0 0
      %652 = vmatpush1.bf16.msra.mxu0 0
      %653 = vmatprep.subr.bf16.mxu0 0
      %654 = vmatpush1.bf16.msra.mxu0 0
      %655 = vmatprep.subr.bf16.mxu0 0
      %656 = vmatpush1.bf16.msra.mxu0 0
      %657 = vmatprep.subr.bf16.mxu0 0
      %658 = vmatpush1.bf16.msra.mxu0 0
      %659 = vmatprep.subr.bf16.mxu0 0
      %660 = vmatpush1.bf16.msra.mxu0 0
      %661 = vmatprep.mubr.bf16.mxu0 0
      %662 = vmatmul.mubr.bf16.gmra.mrb[0].mxu0 %v542
      %v663 = vpop.f32.mrb[0].mxu0
      %v664 = vadd.f32 %v579, %v663
      %v665 = vpop.f32.mrb[0].mxu0
      %v666 = vpop.f32.mrb[0].mxu0
      %v667 = vadd.f32 %v579, %v666
      %v668 = vpop.f32.mrb[0].mxu0
      %669 = vmatprep.mubr.bf16.mxu0 0
      %670 = vmatmul.mubr.bf16.gmra.mrb[0].mxu0 %v543
      %v671 = vpop.f32.mrb[0].mxu0
      %v672 = vadd.f32 %v579, %v671
      %v673 = vpop.f32.mrb[0].mxu0
      %v674 = vpop.f32.mrb[0].mxu0
      %v675 = vadd.f32 %v579, %v674
      %v676 = vpop.f32.mrb[0].mxu0
      %677 = vmatprep.mubr.bf16.mxu0 0
      %678 = vmatmul.mubr.bf16.gmra.mrb[0].mxu0 %v544
      %v679 = vpop.f32.mrb[0].mxu0
      %v680 = vadd.f32 %v579, %v679
      %v681 = vpop.f32.mrb[0].mxu0
      %v682 = vpop.f32.mrb[0].mxu0
      %v683 = vadd.f32 %v579, %v682
      %v684 = vpop.f32.mrb[0].mxu0
      %685 = vmatprep.mubr.bf16.mxu0 0
      %686 = vmatmul.mubr.bf16.gmra.mrb[0].mxu0 %v545
      %v687 = vpop.f32.mrb[0].mxu0
      %v688 = vadd.f32 %v579, %v687
      %v689 = vpop.f32.mrb[0].mxu0
      %v690 = vpop.f32.mrb[0].mxu0
      %v691 = vadd.f32 %v579, %v690
      %v692 = vpop.f32.mrb[0].mxu0
      %693 = vmatprep.mubr.bf16.mxu0 0
      %694 = vmatmul.mubr.bf16.gmra.mrb[0].mxu0 %v546
      %v695 = vpop.f32.mrb[0].mxu0
      %v696 = vadd.f32 %v579, %v695
      %v697 = vpop.f32.mrb[0].mxu0
      %v698 = vpop.f32.mrb[0].mxu0
      %v699 = vadd.f32 %v579, %v698
      %v700 = vpop.f32.mrb[0].mxu0
      %701 = vmatprep.mubr.bf16.mxu0 0
      %702 = vmatmul.mubr.bf16.gmra.mrb[0].mxu0 %v547
      %v703 = vpop.f32.mrb[0].mxu0
      %v704 = vadd.f32 %v579, %v703
      %v705 = vpop.f32.mrb[0].mxu0
      %v706 = vpop.f32.mrb[0].mxu0
      %v707 = vadd.f32 %v579, %v706
      %v708 = vpop.f32.mrb[0].mxu0
      %709 = vmatprep.mubr.bf16.mxu0 0
      %710 = vmatmul.mubr.bf16.gmra.mrb[0].mxu0 %v548
      %v711 = vpop.f32.mrb[0].mxu0
      %v712 = vadd.f32 %v579, %v711
      %v713 = vpop.f32.mrb[0].mxu0
      %v714 = vpop.f32.mrb[0].mxu0
      %v715 = vadd.f32 %v579, %v714
      %v716 = vpop.f32.mrb[0].mxu0
      %717 = vmatprep.mubr.bf16.mxu0 0
      %718 = vmatmul.mubr.bf16.gmra.mrb[0].mxu0 %v549
      %v719 = vpop.f32.mrb[0].mxu0
      %v720 = vadd.f32 %v579, %v719
      %v721 = vpop.f32.mrb[0].mxu0
      %v722 = vpop.f32.mrb[0].mxu0
      %v723 = vadd.f32 %v579, %v722
      %v724 = vpop.f32.mrb[0].mxu0
      %725 = vmatprep.mubr.bf16.mxu0 0
      %726 = vmatmul.mubr.bf16.gmra.mrb[0].mxu0 %v550
      %v727 = vpop.f32.mrb[0].mxu0
      %v728 = vadd.f32 %v579, %v727
      %v729 = vpop.f32.mrb[0].mxu0
      %v730 = vpop.f32.mrb[0].mxu0
      %v731 = vadd.f32 %v579, %v730
      %v732 = vpop.f32.mrb[0].mxu0
      %733 = vmatprep.mubr.bf16.mxu0 0
      %734 = vmatmul.mubr.bf16.gmra.mrb[0].mxu0 %v551
      %v735 = vpop.f32.mrb[0].mxu0
      %v736 = vadd.f32 %v579, %v735
      %v737 = vpop.f32.mrb[0].mxu0
      %v738 = vpop.f32.mrb[0].mxu0
      %v739 = vadd.f32 %v579, %v738
      %v740 = vpop.f32.mrb[0].mxu0
      %741 = vmatprep.mubr.bf16.mxu0 0
      %742 = vmatmul.mubr.bf16.gmra.mrb[0].mxu0 %v552
      %v743 = vpop.f32.mrb[0].mxu0
      %v744 = vadd.f32 %v579, %v743
      %v745 = vpop.f32.mrb[0].mxu0
      %v746 = vpop.f32.mrb[0].mxu0
      %v747 = vadd.f32 %v579, %v746
      %v748 = vpop.f32.mrb[0].mxu0
      %749 = vmatprep.mubr.bf16.mxu0 0
      %750 = vmatmul.mubr.bf16.gmra.mrb[0].mxu0 %v553
      %v751 = vpop.f32.mrb[0].mxu0
      %v752 = vadd.f32 %v579, %v751
      %v753 = vpop.f32.mrb[0].mxu0
      %v754 = vpop.f32.mrb[0].mxu0
      %v755 = vadd.f32 %v579, %v754
      %v756 = vpop.f32.mrb[0].mxu0
      %757 = vmatprep.mubr.bf16.mxu0 0
      %758 = vmatmul.mubr.bf16.gmra.mrb[0].mxu0 %v554
      %v759 = vpop.f32.mrb[0].mxu0
      %v760 = vadd.f32 %v579, %v759
      %v761 = vpop.f32.mrb[0].mxu0
      %v762 = vpop.f32.mrb[0].mxu0
      %v763 = vadd.f32 %v579, %v762
      %v764 = vpop.f32.mrb[0].mxu0
      %765 = vmatprep.mubr.bf16.mxu0 0
      %766 = vmatmul.mubr.bf16.gmra.mrb[0].mxu0 %v555
      %v767 = vpop.f32.mrb[0].mxu0
      %v768 = vadd.f32 %v579, %v767
      %v769 = vpop.f32.mrb[0].mxu0
      %v770 = vpop.f32.mrb[0].mxu0
      %v771 = vadd.f32 %v579, %v770
      %v772 = vpop.f32.mrb[0].mxu0
      %773 = vmatprep.mubr.bf16.mxu0 0
      %774 = vmatmul.mubr.bf16.gmra.mrb[0].mxu0 %v556
      %v775 = vpop.f32.mrb[0].mxu0
      %v776 = vadd.f32 %v579, %v775
      %v777 = vpop.f32.mrb[0].mxu0
      %v778 = vpop.f32.mrb[0].mxu0
      %v779 = vadd.f32 %v579, %v778
      %v780 = vpop.f32.mrb[0].mxu0
      %781 = vmatprep.mubr.bf16.mxu0 0
      %782 = vmatmul.mubr.bf16.gmra.mrb[0].mxu0 %v557
      %v783 = vpop.f32.mrb[0].mxu0
      %v784 = vadd.f32 %v579, %v783
      %v785 = vpop.f32.mrb[0].mxu0
      %v786 = vpop.f32.mrb[0].mxu0
      %v787 = vadd.f32 %v579, %v786
      %v788 = vpop.f32.mrb[0].mxu0
      %789 = vdwg.mxu0
      %790 = vst.msk [vmem:[%s226] sm:$0xff] %vm300, %v664
      %791 = vst.msk [vmem:[%s226 + $0x8] sm:$0xff] %vm300, %v667
      %792 = vst.msk [vmem:[%s226 + $0x10] sm:$0xff] %vm300, %v672
      %793 = vst.msk [vmem:[%s226 + $0x18] sm:$0xff] %vm300, %v675
      %794 = vst.msk [vmem:[%s226 + $0x20] sm:$0xff] %vm300, %v680
      %795 = vst.msk [vmem:[%s226 + $0x28] sm:$0xff] %vm300, %v683
      %796 = vst.msk [vmem:[%s226 + $0x30] sm:$0xff] %vm300, %v688
      %797 = vst.msk [vmem:[%s226 + $0x38] sm:$0xff] %vm300, %v691
      %798 = vst.msk [vmem:[%s226 + $0x40] sm:$0xff] %vm300, %v696
      %799 = vst.msk [vmem:[%s226 + $0x48] sm:$0xff] %vm300, %v699
      %800 = vst.msk [vmem:[%s226 + $0x50] sm:$0xff] %vm300, %v704
      %801 = vst.msk [vmem:[%s226 + $0x58] sm:$0xff] %vm300, %v707
      %802 = vst.msk [vmem:[%s226 + $0x60] sm:$0xff] %vm300, %v712
      %803 = vst.msk [vmem:[%s226 + $0x68] sm:$0xff] %vm300, %v715
      %804 = vst.msk [vmem:[%s226 + $0x70] sm:$0xff] %vm300, %v720
      %805 = vst.msk [vmem:[%s226 + $0x78] sm:$0xff] %vm300, %v723
      %806 = vst.msk [vmem:[%s226 + $0x80] sm:$0xff] %vm300, %v728
      %807 = vst.msk [vmem:[%s226 + $0x88] sm:$0xff] %vm300, %v731
      %808 = vst.msk [vmem:[%s226 + $0x90] sm:$0xff] %vm300, %v736
      %809 = vst.msk [vmem:[%s226 + $0x98] sm:$0xff] %vm300, %v739
      %810 = vst.msk [vmem:[%s226 + $0xa0] sm:$0xff] %vm300, %v744
      %811 = vst.msk [vmem:[%s226 + $0xa8] sm:$0xff] %vm300, %v747
      %812 = vst.msk [vmem:[%s226 + $0xb0] sm:$0xff] %vm300, %v752
      %813 = vst.msk [vmem:[%s226 + $0xb8] sm:$0xff] %vm300, %v755
      %814 = vst.msk [vmem:[%s226 + $0xc0] sm:$0xff] %vm300, %v760
      %815 = vst.msk [vmem:[%s226 + $0xc8] sm:$0xff] %vm300, %v763
      %816 = vst.msk [vmem:[%s226 + $0xd0] sm:$0xff] %vm300, %v768
      %817 = vst.msk [vmem:[%s226 + $0xd8] sm:$0xff] %vm300, %v771
      %818 = vst.msk [vmem:[%s226 + $0xe0] sm:$0xff] %vm300, %v776
      %819 = vst.msk [vmem:[%s226 + $0xe8] sm:$0xff] %vm300, %v779
      %820 = vst.msk [vmem:[%s226 + $0xf0] sm:$0xff] %vm300, %v784
      %821 = vst.msk [vmem:[%s226 + $0xf8] sm:$0xff] %vm300, %v787
      %s822 = smul.u32 32, %s16
      %p823 = scmp.lt.s32.totalorder %s822, 63
      %s824 = scalar_select %p823, %s822, 63
      %s825 = smul.addr %s824, 8
      %s826 = scalar_lea.vmem %s5, %s825
      // Predicated region
      $region41: #{mlp_forward.1} parent=39 // pred_check
        %p827 = pneg %p144
      $region42: #{mlp_forward.1} parent=39 // pred_check_branch
        %829 = sbr.rel (%p827) target = $region44
      $region43: #{mlp_forward.1} parent=39 // pred_region
        %s830 = smul.u32 32, %s16
      $region44: #{mlp_forward.1} parent=39 // pred_fallthru
        _
    $region40: #{mlp_forward.1} parent=5 // pred_fallthru
      _
    %p831 = scmp.le.s32.totalorder 2, %s11
    // Predicated region
    $region45: #{mlp_forward.1} parent=5 // pred_check
      %p832 = pneg %p831
    $region46: #{mlp_forward.1} parent=5 // pred_check_branch
      %834 = sbr.rel (%p832) target = $region48
    $region47: #{mlp_forward.1} parent=5 // pred_region
      %s835 = ssub.s32 %s11, 2
      // Predicated region
      $region49: #{mlp_forward.1} parent=47 // pred_check
        %p836 = pneg %p150
      $region50: #{mlp_forward.1} parent=47 // pred_check_branch
        %838 = sbr.rel (%p836) target = $region52
      $region51: #{mlp_forward.1} parent=47 // pred_region
        %s839 = smul.u32 32, %s17
        %p840 = scmp.lt.s32.totalorder %s839, 63
        %s841 = scalar_select %p840, %s839, 63
        %s842 = smul.addr %s841, 8
        %s843 = scalar_lea.vmem %s5, %s842
      $region52: #{mlp_forward.1} parent=47 // pred_fallthru
        _
    $region48: #{mlp_forward.1} parent=5 // pred_fallthru
      _
  $region6: #{mlp_forward.1} parent=0 // loop_footer
    %s15 = sadd.s32 1, %s11
  $region7: #{mlp_forward.1} parent=0 // loop_footer_branch
    %10 = sbr.rel target = $region3
  $region8: #{mlp_forward.1} parent=0 // loop_exit
    _

</llo_original>
